<compile_context>
chip_gen: v7x
topology: tpu7x:2x2x1
jax: 0.10.0
libtpu: 0.0.40
codegen_flags: <defaults>
</compile_context>

<pallas_src>
import functools

import jax
import jax.numpy as jnp
from jax.experimental import pallas as pl
from jax.experimental.pallas import tpu as pltpu


def _shift_kernel(shift_ref, x_ref, o_ref, *, pad):
    """Processes one (B, C, H, W) block of samples per grid step.

    shift_ref : SMEM (2*N,) int32; [2*i] = width shift, [2*i+1] = height shift
    x_ref     : VMEM (B, C, H, W) input block
    o_ref     : VMEM (B, C, H, W) output block
    """
    B, C, H, W = x_ref.shape
    cdt = x_ref.dtype
    step = pl.program_id(0)

    for b in range(B):  # static unroll over samples in the block
        n_abs = step * B + b
        sx = shift_ref[2 * n_abs]        # shift along width  (lanes)
        sy = shift_ref[2 * n_abs + 1]    # shift along height (sublanes)

        # One-hot column-selection matrix: S[r, j] = (r == clip(j+sx-pad, 0, W-1))
        r_w = jax.lax.broadcasted_iota(jnp.int32, (W, W), 0)
        j_w = jax.lax.broadcasted_iota(jnp.int32, (W, W), 1)
        S = (r_w == jnp.clip(j_w + sx - pad, 0, W - 1)).astype(cdt)

        # One-hot row-selection matrix: R[i, r] = (r == clip(i+sy-pad, 0, H-1))
        i_h = jax.lax.broadcasted_iota(jnp.int32, (H, H), 0)
        r_h = jax.lax.broadcasted_iota(jnp.int32, (H, H), 1)
        R = (r_h == jnp.clip(i_h + sy - pad, 0, H - 1)).astype(cdt)

        # Column shift: single fused (C*H, W) @ (W, W) matmul over all channels.
        x_b = x_ref[b]                                         # (C, H, W)
        y = jnp.dot(x_b.reshape(C * H, W), S,
                    preferred_element_type=jnp.float32)        # (C*H, W) f32
        y = y.astype(cdt).reshape(C, H, W)                     # exact (one-hot)

        # Row shift: batched (C, H, H) @ (C, H, W) matmul, output already in
        # (C, H, W) layout -> one slab store per sample.
        Rb = jnp.broadcast_to(R[None, :, :], (C, H, H))
        out = jax.lax.dot_general(
            Rb, y,
            dimension_numbers=(((2,), (1,)), ((0,), (0,))),
            preferred_element_type=jnp.float32)                # (C, H, W)
        o_ref[b] = out.astype(o_ref.dtype)


def _pick_block(n, c, h, w, itemsize):
    """Pick a batch-block size: big tiles, but safe in scoped VMEM everywhere."""
    per_sample = c * h * w * itemsize
    budget = 8 * 1024 * 1024               # double-buffered in+out ~= 4*B*per_sample
    b = max(1, min(n, budget // (4 * per_sample)))
    if n >= 2:
        b = min(b, max(1, n // 2))         # keep >=2 grid steps (v7x dual-TC)
    while n % b:                            # make B a divisor of N
        b -= 1
    return b


def random_shifts_aug(x, shifts, pad, block_n=None):
    """x: (N, C, H, W); shifts: (N, 2) int32 in [0, 2*pad], (col, row) order."""
    N, C, H, W = x.shape
    assert H == W
    if block_n is None:
        block_n = _pick_block(N, C, H, W, jnp.dtype(x.dtype).itemsize)
    assert N % block_n == 0
    grid = (N // block_n,)

    kernel = functools.partial(_shift_kernel, pad=pad)

    # Flat 1-D shifts avoid the (N, 2) -> (ceil(N/8)*8, 128) SMEM padding blow-up.
    shifts_flat = shifts.reshape(-1).astype(jnp.int32)         # (2*N,)

    grid_spec = pltpu.PrefetchScalarGridSpec(
        num_scalar_prefetch=1,
        grid=grid,
        in_specs=[pl.BlockSpec((block_n, C, H, W), lambda n, s: (n, 0, 0, 0))],
        out_specs=pl.BlockSpec((block_n, C, H, W), lambda n, s: (n, 0, 0, 0)),
    )

    itemsize = jnp.dtype(x.dtype).itemsize
    cost = pl.CostEstimate(
        flops=2 * N * C * H * W * (W + H),        # column + row one-hot matmuls
        transcendentals=0,
        bytes_accessed=2 * N * C * H * W * itemsize + 2 * N * 4,
    )

    return pl.pallas_call(
        kernel,
        out_shape=jax.ShapeDtypeStruct((N, C, H, W), x.dtype),
        grid_spec=grid_spec,
        compiler_params=pltpu.CompilerParams(
            dimension_semantics=("parallel",)),
        cost_estimate=cost,
    )(shifts_flat, x)


class RandomShiftsAugPallas:
    """Pallas equivalent of drqv2.RandomShiftsAug (explicit PRNG key)."""

    def __init__(self, pad):
        self.pad = pad

    def __call__(self, x, key):
        n, _, h, w = x.shape
        assert h == w
        shifts = jax.random.randint(
            key, (n, 2), 0, 2 * self.pad + 1, dtype=jnp.int32)
        return random_shifts_aug(x, shifts, self.pad)


if __name__ == "__main__":
    key = jax.random.PRNGKey(0)
    k_obs, k_shift = jax.random.split(key)

    N, C, H, W = 4, 4, 16, 16
    pad = 4
    x = jax.random.uniform(k_obs, (N, C, H, W), jnp.float32, 0.0, 255.0)

    aug = RandomShiftsAugPallas(pad)
    y = aug(x, k_shift)
    jax.block_until_ready(y)
    assert y.shape == (N, C, H, W), y.shape

    # Pure-JAX reference: integer crop of the replicate-padded image with the
    # same (deterministic) shifts.
    shifts = jax.random.randint(k_shift, (N, 2), 0, 2 * pad + 1,
                                dtype=jnp.int32)
    xp = jnp.pad(x, ((0, 0), (0, 0), (pad, pad), (pad, pad)), mode="edge")
    ref = jnp.stack([
        jax.lax.dynamic_slice(xp[i], (0, shifts[i, 1], shifts[i, 0]),
                              (C, H, W))
        for i in range(N)
    ])
    err = float(jnp.max(jnp.abs(y - ref)))
    assert jnp.allclose(y, ref, atol=1e-5), err

    print("KERNEL_OK")
</pallas_src>

<mosaic_0001>
module attributes {stable_mosaic.version = 11 : i64} {
  func.func @_shift_kernel(%arg0: i32, %arg1: memref<8xi32, #tpu.memory_space<smem>>, %arg2: memref<2x4x16x16xf32, #tpu.memory_space<vmem>>, %arg3: memref<2x4x16x16xf32, #tpu.memory_space<vmem>>) attributes {dimension_semantics = [#tpu.dimension_semantics<parallel>], iteration_bounds = array<i64: 2>, scalar_prefetch = 1 : i64, scratch_operands = 0 : i64, tpu.core_type = #tpu.core_type<tc>, window_params = [{transform_indices = @transform_0, window_bounds = array<i64: 2, 4, 16, 16>}, {transform_indices = @transform_1, window_bounds = array<i64: 2, 4, 16, 16>}]} {
    %c2_i32 = arith.constant 2 : i32
    %0 = arith.muli %arg0, %c2_i32 : i32
    %c0_i32 = arith.constant 0 : i32
    %1 = arith.addi %0, %c0_i32 : i32
    %c2_i32_0 = arith.constant 2 : i32
    %2 = arith.muli %c2_i32_0, %1 : i32
    %3 = arith.index_cast %2 : i32 to index
    %4 = memref.load %arg1[%3] : memref<8xi32, #tpu.memory_space<smem>>
    %c2_i32_1 = arith.constant 2 : i32
    %5 = arith.muli %c2_i32_1, %1 : i32
    %c1_i32 = arith.constant 1 : i32
    %6 = arith.addi %5, %c1_i32 : i32
    %7 = arith.index_cast %6 : i32 to index
    %8 = memref.load %arg1[%7] : memref<8xi32, #tpu.memory_space<smem>>
    %9 = tpu.iota {dimensions = array<i32: 0>} : vector<16x16xi32>
    %10 = tpu.iota {dimensions = array<i32: 1>} : vector<16x16xi32>
    %11 = vector.broadcast %4 : i32 to vector<16x16xi32>
    %12 = arith.addi %10, %11 : vector<16x16xi32>
    %c4_i32 = arith.constant 4 : i32
    %13 = vector.broadcast %c4_i32 : i32 to vector<16x16xi32>
    %14 = arith.subi %12, %13 : vector<16x16xi32>
    %c0_i32_2 = arith.constant 0 : i32
    %c15_i32 = arith.constant 15 : i32
    %15 = vector.broadcast %c0_i32_2 : i32 to vector<16x16xi32>
    %16 = arith.maxsi %15, %14 : vector<16x16xi32>
    %17 = vector.broadcast %c15_i32 : i32 to vector<16x16xi32>
    %18 = arith.minsi %17, %16 : vector<16x16xi32>
    %19 = arith.cmpi eq, %9, %18 : vector<16x16xi32>
    %20 = arith.extui %19 : vector<16x16xi1> to vector<16x16xi32>
    %21 = arith.sitofp %20 : vector<16x16xi32> to vector<16x16xf32>
    %22 = tpu.iota {dimensions = array<i32: 0>} : vector<16x16xi32>
    %23 = tpu.iota {dimensions = array<i32: 1>} : vector<16x16xi32>
    %24 = vector.broadcast %8 : i32 to vector<16x16xi32>
    %25 = arith.addi %22, %24 : vector<16x16xi32>
    %c4_i32_3 = arith.constant 4 : i32
    %26 = vector.broadcast %c4_i32_3 : i32 to vector<16x16xi32>
    %27 = arith.subi %25, %26 : vector<16x16xi32>
    %c0_i32_4 = arith.constant 0 : i32
    %c15_i32_5 = arith.constant 15 : i32
    %28 = vector.broadcast %c0_i32_4 : i32 to vector<16x16xi32>
    %29 = arith.maxsi %28, %27 : vector<16x16xi32>
    %30 = vector.broadcast %c15_i32_5 : i32 to vector<16x16xi32>
    %31 = arith.minsi %30, %29 : vector<16x16xi32>
    %32 = arith.cmpi eq, %23, %31 : vector<16x16xi32>
    %33 = arith.extui %32 : vector<16x16xi1> to vector<16x16xi32>
    %34 = arith.sitofp %33 : vector<16x16xi32> to vector<16x16xf32>
    %c0 = arith.constant 0 : index
    %c0_6 = arith.constant 0 : index
    %c0_7 = arith.constant 0 : index
    %c0_8 = arith.constant 0 : index
    %35 = vector.load %arg2[%c0, %c0_6, %c0_7, %c0_8] : memref<2x4x16x16xf32, #tpu.memory_space<vmem>>, vector<1x4x16x16xf32>
    %36 = vector.shape_cast %35 : vector<1x4x16x16xf32> to vector<4x16x16xf32>
    %37 = vector.shape_cast %36 : vector<4x16x16xf32> to vector<64x16xf32>
    %cst = arith.constant dense<0.000000e+00> : vector<64x16xf32>
    %38 = tpu.matmul %37, %21, %cst {dimension_numbers = #tpu.dot_dimension_numbers<[1], [0], [0], [1], [0, 0, 1, 1], [], []>} : vector<64x16xf32>, vector<16x16xf32>, vector<64x16xf32> -> vector<64x16xf32>
    %39 = vector.shape_cast %38 : vector<64x16xf32> to vector<4x16x16xf32>
    %40 = vector.shape_cast %34 : vector<16x16xf32> to vector<1x16x16xf32>
    %41 = vector.shape_cast %40 : vector<1x16x16xf32> to vector<1x16x16xf32>
    %42 = vector.broadcast %41 : vector<1x16x16xf32> to vector<4x16x16xf32>
    %cst_9 = arith.constant dense<0.000000e+00> : vector<4x16x16xf32>
    %43 = tpu.matmul %42, %39, %cst_9 {dimension_numbers = #tpu.dot_dimension_numbers<[2], [1], [1], [2], [0, 0, 0, 1, 1, 2], [0], [0]>} : vector<4x16x16xf32>, vector<4x16x16xf32>, vector<4x16x16xf32> -> vector<4x16x16xf32>
    %c0_10 = arith.constant 0 : index
    %c0_11 = arith.constant 0 : index
    %c0_12 = arith.constant 0 : index
    %c0_13 = arith.constant 0 : index
    %44 = vector.load %arg3[%c0_10, %c0_11, %c0_12, %c0_13] : memref<2x4x16x16xf32, #tpu.memory_space<vmem>>, vector<1x4x16x16xf32>
    %45 = vector.shape_cast %44 : vector<1x4x16x16xf32> to vector<4x16x16xf32>
    %46 = vector.shape_cast %43 : vector<4x16x16xf32> to vector<1x4x16x16xf32>
    tpu.vector_store %arg3[%c0_10, %c0_11, %c0_12, %c0_13], %46 {strides = array<i32>} : memref<2x4x16x16xf32, #tpu.memory_space<vmem>>, vector<1x4x16x16xf32>,
    %c2_i32_14 = arith.constant 2 : i32
    %47 = arith.muli %arg0, %c2_i32_14 : i32
    %c1_i32_15 = arith.constant 1 : i32
    %48 = arith.addi %47, %c1_i32_15 : i32
    %c2_i32_16 = arith.constant 2 : i32
    %49 = arith.muli %c2_i32_16, %48 : i32
    %50 = arith.index_cast %49 : i32 to index
    %51 = memref.load %arg1[%50] : memref<8xi32, #tpu.memory_space<smem>>
    %c2_i32_17 = arith.constant 2 : i32
    %52 = arith.muli %c2_i32_17, %48 : i32
    %c1_i32_18 = arith.constant 1 : i32
    %53 = arith.addi %52, %c1_i32_18 : i32
    %54 = arith.index_cast %53 : i32 to index
    %55 = memref.load %arg1[%54] : memref<8xi32, #tpu.memory_space<smem>>
    %56 = tpu.iota {dimensions = array<i32: 0>} : vector<16x16xi32>
    %57 = tpu.iota {dimensions = array<i32: 1>} : vector<16x16xi32>
    %58 = vector.broadcast %51 : i32 to vector<16x16xi32>
    %59 = arith.addi %57, %58 : vector<16x16xi32>
    %c4_i32_19 = arith.constant 4 : i32
    %60 = vector.broadcast %c4_i32_19 : i32 to vector<16x16xi32>
    %61 = arith.subi %59, %60 : vector<16x16xi32>
    %c0_i32_20 = arith.constant 0 : i32
    %c15_i32_21 = arith.constant 15 : i32
    %62 = vector.broadcast %c0_i32_20 : i32 to vector<16x16xi32>
    %63 = arith.maxsi %62, %61 : vector<16x16xi32>
    %64 = vector.broadcast %c15_i32_21 : i32 to vector<16x16xi32>
    %65 = arith.minsi %64, %63 : vector<16x16xi32>
    %66 = arith.cmpi eq, %56, %65 : vector<16x16xi32>
    %67 = arith.extui %66 : vector<16x16xi1> to vector<16x16xi32>
    %68 = arith.sitofp %67 : vector<16x16xi32> to vector<16x16xf32>
    %69 = tpu.iota {dimensions = array<i32: 0>} : vector<16x16xi32>
    %70 = tpu.iota {dimensions = array<i32: 1>} : vector<16x16xi32>
    %71 = vector.broadcast %55 : i32 to vector<16x16xi32>
    %72 = arith.addi %69, %71 : vector<16x16xi32>
    %c4_i32_22 = arith.constant 4 : i32
    %73 = vector.broadcast %c4_i32_22 : i32 to vector<16x16xi32>
    %74 = arith.subi %72, %73 : vector<16x16xi32>
    %c0_i32_23 = arith.constant 0 : i32
    %c15_i32_24 = arith.constant 15 : i32
    %75 = vector.broadcast %c0_i32_23 : i32 to vector<16x16xi32>
    %76 = arith.maxsi %75, %74 : vector<16x16xi32>
    %77 = vector.broadcast %c15_i32_24 : i32 to vector<16x16xi32>
    %78 = arith.minsi %77, %76 : vector<16x16xi32>
    %79 = arith.cmpi eq, %70, %78 : vector<16x16xi32>
    %80 = arith.extui %79 : vector<16x16xi1> to vector<16x16xi32>
    %81 = arith.sitofp %80 : vector<16x16xi32> to vector<16x16xf32>
    %c1 = arith.constant 1 : index
    %c0_25 = arith.constant 0 : index
    %c0_26 = arith.constant 0 : index
    %c0_27 = arith.constant 0 : index
    %82 = vector.load %arg2[%c1, %c0_25, %c0_26, %c0_27] : memref<2x4x16x16xf32, #tpu.memory_space<vmem>>, vector<1x4x16x16xf32>
    %83 = vector.shape_cast %82 : vector<1x4x16x16xf32> to vector<4x16x16xf32>
    %84 = vector.shape_cast %83 : vector<4x16x16xf32> to vector<64x16xf32>
    %cst_28 = arith.constant dense<0.000000e+00> : vector<64x16xf32>
    %85 = tpu.matmul %84, %68, %cst_28 {dimension_numbers = #tpu.dot_dimension_numbers<[1], [0], [0], [1], [0, 0, 1, 1], [], []>} : vector<64x16xf32>, vector<16x16xf32>, vector<64x16xf32> -> vector<64x16xf32>
    %86 = vector.shape_cast %85 : vector<64x16xf32> to vector<4x16x16xf32>
    %87 = vector.shape_cast %81 : vector<16x16xf32> to vector<1x16x16xf32>
    %88 = vector.shape_cast %87 : vector<1x16x16xf32> to vector<1x16x16xf32>
    %89 = vector.broadcast %88 : vector<1x16x16xf32> to vector<4x16x16xf32>
    %cst_29 = arith.constant dense<0.000000e+00> : vector<4x16x16xf32>
    %90 = tpu.matmul %89, %86, %cst_29 {dimension_numbers = #tpu.dot_dimension_numbers<[2], [1], [1], [2], [0, 0, 0, 1, 1, 2], [0], [0]>} : vector<4x16x16xf32>, vector<4x16x16xf32>, vector<4x16x16xf32> -> vector<4x16x16xf32>
    %c1_30 = arith.constant 1 : index
    %c0_31 = arith.constant 0 : index
    %c0_32 = arith.constant 0 : index
    %c0_33 = arith.constant 0 : index
    %91 = vector.load %arg3[%c1_30, %c0_31, %c0_32, %c0_33] : memref<2x4x16x16xf32, #tpu.memory_space<vmem>>, vector<1x4x16x16xf32>
    %92 = vector.shape_cast %91 : vector<1x4x16x16xf32> to vector<4x16x16xf32>
    %93 = vector.shape_cast %90 : vector<4x16x16xf32> to vector<1x4x16x16xf32>
    tpu.vector_store %arg3[%c1_30, %c0_31, %c0_32, %c0_33], %93 {strides = array<i32>} : memref<2x4x16x16xf32, #tpu.memory_space<vmem>>, vector<1x4x16x16xf32>,
    return
  }
  func.func @transform_0(%arg0: i32, %arg1: memref<8xi32, #tpu.memory_space<smem>>) -> (i32, i32, i32, i32) {
    %c0_i32 = arith.constant 0 : i32
    %c0_i32_0 = arith.constant 0 : i32
    %c0_i32_1 = arith.constant 0 : i32
    %c0_i32_2 = arith.constant 0 : i32
    return %arg0, %c0_i32, %c0_i32_0, %c0_i32_1 : i32, i32, i32, i32
  }
  func.func @transform_1(%arg0: i32, %arg1: memref<8xi32, #tpu.memory_space<smem>>) -> (i32, i32, i32, i32) {
    %c0_i32 = arith.constant 0 : i32
    %c0_i32_0 = arith.constant 0 : i32
    %c0_i32_1 = arith.constant 0 : i32
    %c0_i32_2 = arith.constant 0 : i32
    return %arg0, %c0_i32, %c0_i32_0, %c0_i32_1 : i32, i32, i32, i32
  }
}

</mosaic_0001>

<llo_original>
// kernel: tpu_custom_call.1
$region0: #{tpu_custom_call.1}
  #allocation0 [shape = 'u32[]', space=smem, size = 0x4, offset = 0x4, fixed_abs, tag = 'smem constant byte address 0x4 - core index']
  #allocation1 [shape = 'u32[144,128]{1,0:T(1,128)}', space=vmem, size = 0x12000, scoped, tag = 'internal scratch']
  #allocation2 [shape = 's32[1]{0}', space=sflag, size = 0x4, scoped, tag = 'scoped memory for tpu_custom_call.1']
  #allocation3 [shape = 'u8[512]{0}', space=smem, size = 0x200, scoped, tag = 'prefetched SMEM operand 0']
  %s0 = inlined_call_operand.hbm [shape: s32[8], index: 0, kind: input, shape index: {}]
  %s1 = inlined_call_operand.hbm [shape: f32[4,4,16,16], index: 1, kind: input, shape index: {}]
  %s2 = inlined_call_operand.hbm [shape: f32[4,4,16,16], index: 2, kind: output, shape index: {}]
  %s3 = sld [smem:[#allocation0]]
  $region41: #{tpu_custom_call.1} parent=0
    _
  %s5 = ssub.s32 1, %s3
  %s6 = scalar_select 0, %s5, %s3
  %8 = dma.hbm_to_smem %s0, 16, [#allocation3], [#allocation2]
  %9 = dma.done [#allocation2], 16
  %10 = sfence
  $region1: #{tpu_custom_call.1} parent=0
    #allocation4 [shape = 'u8[131072]{0}', space=vmem, size = 0x20000, scoped, tag = 'input window, operand 1']
    #allocation5 [shape = 's32[2]{0}', space=sflag, size = 0x8, scoped, tag = 'scoped memory for tpu_custom_call.1']
    #allocation6 [shape = 's32[2]{0}', space=sflag, size = 0x8, scoped, tag = 'scoped memory for tpu_custom_call.1']
    #allocation7 [shape = 'u8[131072]{0}', space=vmem, size = 0x20000, scoped, tag = 'output window, operand 0']
    %11 = vsyncpa [#allocation5], 0
    %s12 = scalar_lea.sflag [#allocation5], 1
    %13 = vsyncpa %s12, 0
    %14 = vsyncpa [#allocation6], 0
    %s15 = scalar_lea.sflag [#allocation6], 1
    %16 = vsyncpa %s15, 0
    loop: start=0, step=1, limit=4
    $region2: #{tpu_custom_call.1} parent=1 // loop_pre_header
      _
    $region3: #{tpu_custom_call.1} parent=1 // loop_header
      %s18 = sphi 0, %s22
      %p19 = scmp.ge.s32.totalorder %s18, 4
      %s28 = sphi 0, %s30
      %s31 = sphi 0, %s28
      %s32 = sphi 0, %s31
      %s48 = sphi 0, %s32
      %s54 = sphi 0, %s56
      %s57 = sphi 0, %s54
      %s58 = sphi 0, %s57
      %s74 = sphi 0, %s58
    $region4: #{tpu_custom_call.1} parent=1 // loop_header_branch
      %21 = sbr.rel (%p19) target = $region8
    $region5: #{tpu_custom_call.1} parent=1 // loop_body
      %s23 = ssub.s32 %s18, 1
      %s24 = ssub.s32 %s18, 2
      %s25 = sadd.s32 %s18, 1
      %s26 = ssub.s32 %s18, %s25
      %p27 = scmp.eq.s32.totalorder %s26, 0
      %s29 = sadd.s32 %s28, 1
      %s30 = scalar_select %p27, %s28, %s29
      %p33 = pneg %p27
      %p34 = scmp.eq.s32.totalorder %s18, 1
      %p35 = por %p33, %p34
      %p36 = scmp.ne.s32.totalorder %s28, %s31
      %p37 = scmp.eq.s32.totalorder %s18, 0
      %p38 = por %p36, %p37
      %p39 = scmp.ne.s32.totalorder %s28, %s31
      %p40 = scmp.eq.s32.totalorder %s23, 1
      %p41 = por %p39, %p40
      %p42 = scmp.ne.s32.totalorder %s31, %s32
      %p43 = scmp.eq.s32.totalorder %s23, 0
      %p44 = por %p42, %p43
      %p45 = scmp.ne.s32.totalorder %s31, %s32
      %p46 = scmp.eq.s32.totalorder %s24, 1
      %p47 = por %p45, %p46
      %p49 = scmp.ne.s32.totalorder %s32, %s48
      %p50 = scmp.eq.s32.totalorder %s24, 0
      %p51 = por %p49, %p50
      %s52 = ssub.s32 %s18, %s25
      %p53 = scmp.eq.s32.totalorder %s52, 0
      %s55 = sadd.s32 %s54, 1
      %s56 = scalar_select %p53, %s54, %s55
      %p59 = pneg %p53
      %p60 = scmp.eq.s32.totalorder %s18, 1
      %p61 = por %p59, %p60
      %p62 = scmp.ne.s32.totalorder %s54, %s57
      %p63 = scmp.eq.s32.totalorder %s18, 0
      %p64 = por %p62, %p63
      %p65 = scmp.ne.s32.totalorder %s54, %s57
      %p66 = scmp.eq.s32.totalorder %s23, 1
      %p67 = por %p65, %p66
      %p68 = scmp.ne.s32.totalorder %s57, %s58
      %p69 = scmp.eq.s32.totalorder %s23, 0
      %p70 = por %p68, %p69
      %p71 = scmp.ne.s32.totalorder %s57, %s58
      %p72 = scmp.eq.s32.totalorder %s24, 1
      %p73 = por %p71, %p72
      %p75 = scmp.ne.s32.totalorder %s58, %s74
      %p76 = scmp.eq.s32.totalorder %s24, 0
      %p77 = por %p75, %p76
      %p78 = scmp.le.s32.totalorder 1, %s18
      %p79 = scmp.lt.s32.totalorder %s18, 3
      %p80 = pnand %p78, %p79
      %p81 = pneg %p80
      // Predicated region
      $region9: #{tpu_custom_call.1} parent=5 // pred_check
        _
      $region10: #{tpu_custom_call.1} parent=5 // pred_check_branch
        %83 = sbr.rel (%p80) target = $region12
      $region11: #{tpu_custom_call.1} parent=5 // pred_region
        %s84 = ssub.s32 %s18, 1
      $region12: #{tpu_custom_call.1} parent=5 // pred_fallthru
        _
      %p85 = scmp.lt.s32.totalorder %s18, 2
      // Predicated region
      $region13: #{tpu_custom_call.1} parent=5 // pred_check
        %p86 = pneg %p85
      $region14: #{tpu_custom_call.1} parent=5 // pred_check_branch
        %88 = sbr.rel (%p86) target = $region16
      $region15: #{tpu_custom_call.1} parent=5 // pred_region
        // Predicated region
        $region17: #{tpu_custom_call.1} parent=15 // pred_check
          %p89 = pneg %p38
        $region18: #{tpu_custom_call.1} parent=15 // pred_check_branch
          %91 = sbr.rel (%p89) target = $region20
        $region19: #{tpu_custom_call.1} parent=15 // pred_region
          %s92 = sand.u32 %s28, 1
          %s93 = scalar_lea.sflag [#allocation5], %s92
          %s94 = sand.u32 %s28, 1
          %s95 = smul.addr %s94, 128
          %s96 = scalar_lea.vmem [#allocation4], %s95
          %s97 = smul.u32 2, %s18
          %s99 = ssub.s32 2048, 2048
          %100 = vsyncadd %s93, %s99
          %s101 = smul.addr %s97, 8
          %s102 = smul.addr %s101, 128
          %s103 = scalar_lea.hbm %s1, %s102
          %s104 = sshll.u32 %s96, 4
          %s105 = int_to_ptr.vmem [resolvable:$true] %s104
          %110 = dma.hbm_to_vmem [thread:$0]  %s103, 2048, %s105, %s93, 128, 128, 8
        $region20: #{tpu_custom_call.1} parent=15 // pred_fallthru
          _
      $region16: #{tpu_custom_call.1} parent=5 // pred_fallthru
        _
      %p111 = scmp.le.s32.totalorder 1, %s18
      %p112 = scmp.lt.s32.totalorder %s18, 3
      %p113 = pnand %p111, %p112
      %p114 = pneg %p113
      // Predicated region
      $region21: #{tpu_custom_call.1} parent=5 // pred_check
        _
      $region22: #{tpu_custom_call.1} parent=5 // pred_check_branch
        %116 = sbr.rel (%p113) target = $region24
      $region23: #{tpu_custom_call.1} parent=5 // pred_region
        %s117 = ssub.s32 %s18, 1
        %s118 = sand.u32 %s31, 1
        %s119 = scalar_lea.sflag [#allocation5], %s118
        %s120 = sand.u32 %s31, 1
        %s121 = smul.addr %s120, 128
        %s122 = scalar_lea.vmem [#allocation4], %s121
        // Predicated region
        $region25: #{tpu_custom_call.1} parent=23 // pred_check
          %p123 = pneg %p44
        $region26: #{tpu_custom_call.1} parent=23 // pred_check_branch
          %125 = sbr.rel (%p123) target = $region28
        $region27: #{tpu_custom_call.1} parent=23 // pred_region
          %126 = dma.done %s119, 2048
        $region28: #{tpu_custom_call.1} parent=23 // pred_fallthru
          _
        %s127 = sand.u32 %s31, 1
        %s128 = scalar_lea.sflag [#allocation5], %s127
        %s129 = sand.u32 %s31, 1
        %s130 = smul.addr %s129, 128
        %s131 = scalar_lea.vmem [#allocation4], %s130
        %p132 = pneg %p44
        %p133 = pneg %p41
        %p134 = pneg %p70
        %p135 = pneg %p67
        %s136 = sand.u32 %s57, 1
        %s137 = scalar_lea.sflag [#allocation6], %s136
        %s138 = sand.u32 %s57, 1
        %s139 = smul.addr %s138, 128
        %s140 = scalar_lea.vmem [#allocation7], %s139
        %s141 = smul.u32 2, %s23
        %s142 = smul.u32 2, %s23
        %s143 = smul.u32 %s23, 4
        %s144 = sld [smem:[#allocation3 + %s143]]
        %s145 = sadd.s32 %s143, 1
        %s146 = sld [smem:[#allocation3 + %s145]]
        %v147 = vlaneseq
        %v148 = vshrl.u32 %v147, 7
        %v149 = vadd.s32 %v148, 8
        %v150 = vlaneseq
        %v151 = vand.u32 %v150, 127
        %v152 = vstv %s144
        %v153 = vadd.s32 %v151, %v152
        %v154 = vsub.s32 %v153, 4
        %vm155 = vcmp.gt.s32.totalorder %v154, 0
        %v156 = vsel %vm155, %v154, 0
        %vm157 = vcmp.lt.s32.totalorder %v156, 15
        %v158 = vsel %vm157, %v156, 15
        %vm159 = vcmp.eq.s32.totalorder %v148, %v158
        %vm160 = vcmp.eq.s32.totalorder %v149, %v158
        %v161 = vsel %vm159, 1, 0
        %v162 = vsel %vm160, 1, 0
        %v163 = vcvt.s32.f32 %v161
        %v164 = vcvt.s32.f32 %v162
        %v165 = vstv %s146
        %v166 = vadd.s32 %v148, %v165
        %v167 = vadd.s32 %v149, %v165
        %v168 = vsub.s32 %v166, 4
        %v169 = vsub.s32 %v167, 4
        %vm170 = vcmp.gt.s32.totalorder %v168, 0
        %v171 = vsel %vm170, %v168, 0
        %vm172 = vcmp.gt.s32.totalorder %v169, 0
        %v173 = vsel %vm172, %v169, 0
        %vm174 = vcmp.lt.s32.totalorder %v171, 15
        %v175 = vsel %vm174, %v171, 15
        %vm176 = vcmp.lt.s32.totalorder %v173, 15
        %v177 = vsel %vm176, %v173, 15
        %vm178 = vcmp.eq.s32.totalorder %v151, %v175
        %vm179 = vcmp.eq.s32.totalorder %v151, %v177
        %v180 = vsel %vm178, 1, 0
        %v181 = vsel %vm179, 1, 0
        %v182 = vcvt.s32.f32 %v180
        %v183 = vcvt.s32.f32 %v181
        %v184 = vld [vmem:[%s122] sm:$0xff]
        %v185 = vld [vmem:[%s122 + $0x8] sm:$0xff]
        %v186 = vld [vmem:[%s122 + $0x10] sm:$0xff]
        %v187 = vld [vmem:[%s122 + $0x18] sm:$0xff]
        %v188 = vld [vmem:[%s122 + $0x20] sm:$0xff]
        %v189 = vld [vmem:[%s122 + $0x28] sm:$0xff]
        %v190 = vld [vmem:[%s122 + $0x30] sm:$0xff]
        %v191 = vld [vmem:[%s122 + $0x38] sm:$0xff]
        %vm192 = vcmask 130048
        %v194 = vsel %vm192, %v184, 0
        %v197 = vsel %vm192, %v185, 0
        %v200 = vsel %vm192, %v186, 0
        %v203 = vsel %vm192, %v187, 0
        %v206 = vsel %vm192, %v188, 0
        %v209 = vsel %vm192, %v189, 0
        %v212 = vsel %vm192, %v190, 0
        %v215 = vsel %vm192, %v191, 0
        %217 = vmatprep.subr.mxu0 0.0
        %218 = vmatpush1.msra.mxu0 %v163
        %219 = vmatprep.subr.mxu0 0.0
        %220 = vmatpush1.msra.mxu0 %v164
        %221 = vmatprep.subr.mxu0 0.0
        %222 = vmatpush1.msra.mxu0 0.0
        %223 = vmatprep.subr.mxu0 0.0
        %224 = vmatpush1.msra.mxu0 0.0
        %225 = vmatprep.subr.mxu0 0.0
        %226 = vmatpush1.msra.mxu0 0.0
        %227 = vmatprep.subr.mxu0 0.0
        %228 = vmatpush1.msra.mxu0 0.0
        %229 = vmatprep.subr.mxu0 0.0
        %230 = vmatpush1.msra.mxu0 0.0
        %231 = vmatprep.subr.mxu0 0.0
        %232 = vmatpush1.msra.mxu0 0.0
        %233 = vmatprep.subr.mxu0 0.0
        %234 = vmatpush1.msra.mxu0 0.0
        %235 = vmatprep.subr.mxu0 0.0
        %236 = vmatpush1.msra.mxu0 0.0
        %237 = vmatprep.subr.mxu0 0.0
        %238 = vmatpush1.msra.mxu0 0.0
        %239 = vmatprep.subr.mxu0 0.0
        %240 = vmatpush1.msra.mxu0 0.0
        %241 = vmatprep.subr.mxu0 0.0
        %242 = vmatpush1.msra.mxu0 0.0
        %243 = vmatprep.subr.mxu0 0.0
        %244 = vmatpush1.msra.mxu0 0.0
        %245 = vmatprep.subr.mxu0 0.0
        %246 = vmatpush1.msra.mxu0 0.0
        %247 = vmatprep.subr.mxu0 0.0
        %248 = vmatpush1.msra.mxu0 0.0
        %249 = vmatprep.subr.mxu0 0.0
        %250 = vmatpush1.msra.mxu0 0.0
        %251 = vmatprep.subr.mxu0 0.0
        %252 = vmatpush1.msra.mxu0 0.0
        %253 = vmatprep.subr.mxu0 0.0
        %254 = vmatpush1.msra.mxu0 0.0
        %255 = vmatprep.subr.mxu0 0.0
        %256 = vmatpush1.msra.mxu0 0.0
        %257 = vmatprep.subr.mxu0 0.0
        %258 = vmatpush1.msra.mxu0 0.0
        %259 = vmatprep.subr.mxu0 0.0
        %260 = vmatpush1.msra.mxu0 0.0
        %261 = vmatprep.subr.mxu0 0.0
        %262 = vmatpush1.msra.mxu0 0.0
        %263 = vmatprep.subr.mxu0 0.0
        %264 = vmatpush1.msra.mxu0 0.0
        %265 = vmatprep.subr.mxu0 0.0
        %266 = vmatpush1.msra.mxu0 0.0
        %267 = vmatprep.subr.mxu0 0.0
        %268 = vmatpush1.msra.mxu0 0.0
        %269 = vmatprep.subr.mxu0 0.0
        %270 = vmatpush1.msra.mxu0 0.0
        %271 = vmatprep.subr.mxu0 0.0
        %272 = vmatpush1.msra.mxu0 0.0
        %273 = vmatprep.subr.mxu0 0.0
        %274 = vmatpush1.msra.mxu0 0.0
        %275 = vmatprep.subr.mxu0 0.0
        %276 = vmatpush1.msra.mxu0 0.0
        %277 = vmatprep.subr.mxu0 0.0
        %278 = vmatpush1.msra.mxu0 0.0
        %279 = vmatprep.subr.mxu0 0.0
        %280 = vmatpush1.msra.mxu0 0.0
        %281 = vmatprep.mubr.f32.mxu0 0.0
        %282 = vmatmul.mubr.f32.gmra.mrb[0].mxu0 %v194
        %v283 = vpop.f32.mrb[0].mxu0
        %v284 = vadd.f32 0.0, %v283
        %v285 = vpop.f32.mrb[0].mxu0
        %286 = vmatprep.mubr.f32.mxu0 0.0
        %287 = vmatmul.mubr.f32.gmra.mrb[0].mxu0 %v197
        %v288 = vpop.f32.mrb[0].mxu0
        %v289 = vadd.f32 0.0, %v288
        %v290 = vpop.f32.mrb[0].mxu0
        %291 = vmatprep.mubr.f32.mxu0 0.0
        %292 = vmatmul.mubr.f32.gmra.mrb[0].mxu0 %v200
        %v293 = vpop.f32.mrb[0].mxu0
        %v294 = vadd.f32 0.0, %v293
        %v295 = vpop.f32.mrb[0].mxu0
        %296 = vmatprep.mubr.f32.mxu0 0.0
        %297 = vmatmul.mubr.f32.gmra.mrb[0].mxu0 %v203
        %v298 = vpop.f32.mrb[0].mxu0
        %v299 = vadd.f32 0.0, %v298
        %v300 = vpop.f32.mrb[0].mxu0
        %301 = vmatprep.mubr.f32.mxu0 0.0
        %302 = vmatmul.mubr.f32.gmra.mrb[0].mxu0 %v206
        %v303 = vpop.f32.mrb[0].mxu0
        %v304 = vadd.f32 0.0, %v303
        %v305 = vpop.f32.mrb[0].mxu0
        %306 = vmatprep.mubr.f32.mxu0 0.0
        %307 = vmatmul.mubr.f32.gmra.mrb[0].mxu0 %v209
        %v308 = vpop.f32.mrb[0].mxu0
        %v309 = vadd.f32 0.0, %v308
        %v310 = vpop.f32.mrb[0].mxu0
        %311 = vmatprep.mubr.f32.mxu0 0.0
        %312 = vmatmul.mubr.f32.gmra.mrb[0].mxu0 %v212
        %v313 = vpop.f32.mrb[0].mxu0
        %v314 = vadd.f32 0.0, %v313
        %v315 = vpop.f32.mrb[0].mxu0
        %316 = vmatprep.mubr.f32.mxu0 0.0
        %317 = vmatmul.mubr.f32.gmra.mrb[0].mxu0 %v215
        %v318 = vpop.f32.mrb[0].mxu0
        %v319 = vadd.f32 0.0, %v318
        %v320 = vpop.f32.mrb[0].mxu0
        %321 = vdwg.mxu0
        %v323 = vsel %vm192, %v182, 0
        %v326 = vsel %vm192, %v183, 0
        %328 = vmatprep.subr.mxu0 0.0
        %329 = vmatpush1.msra.mxu0 %v284
        %330 = vmatprep.subr.mxu0 0.0
        %331 = vmatpush1.msra.mxu0 %v289
        %332 = vmatprep.subr.mxu0 0.0
        %333 = vmatpush1.msra.mxu0 0.0
        %334 = vmatprep.subr.mxu0 0.0
        %335 = vmatpush1.msra.mxu0 0.0
        %336 = vmatprep.subr.mxu0 0.0
        %337 = vmatpush1.msra.mxu0 0.0
        %338 = vmatprep.subr.mxu0 0.0
        %339 = vmatpush1.msra.mxu0 0.0
        %340 = vmatprep.subr.mxu0 0.0
        %341 = vmatpush1.msra.mxu0 0.0
        %342 = vmatprep.subr.mxu0 0.0
        %343 = vmatpush1.msra.mxu0 0.0
        %344 = vmatprep.subr.mxu0 0.0
        %345 = vmatpush1.msra.mxu0 0.0
        %346 = vmatprep.subr.mxu0 0.0
        %347 = vmatpush1.msra.mxu0 0.0
        %348 = vmatprep.subr.mxu0 0.0
        %349 = vmatpush1.msra.mxu0 0.0
        %350 = vmatprep.subr.mxu0 0.0
        %351 = vmatpush1.msra.mxu0 0.0
        %352 = vmatprep.subr.mxu0 0.0
        %353 = vmatpush1.msra.mxu0 0.0
        %354 = vmatprep.subr.mxu0 0.0
        %355 = vmatpush1.msra.mxu0 0.0
        %356 = vmatprep.subr.mxu0 0.0
        %357 = vmatpush1.msra.mxu0 0.0
        %358 = vmatprep.subr.mxu0 0.0
        %359 = vmatpush1.msra.mxu0 0.0
        %360 = vmatprep.subr.mxu0 0.0
        %361 = vmatpush1.msra.mxu0 0.0
        %362 = vmatprep.subr.mxu0 0.0
        %363 = vmatpush1.msra.mxu0 0.0
        %364 = vmatprep.subr.mxu0 0.0
        %365 = vmatpush1.msra.mxu0 0.0
        %366 = vmatprep.subr.mxu0 0.0
        %367 = vmatpush1.msra.mxu0 0.0
        %368 = vmatprep.subr.mxu0 0.0
        %369 = vmatpush1.msra.mxu0 0.0
        %370 = vmatprep.subr.mxu0 0.0
        %371 = vmatpush1.msra.mxu0 0.0
        %372 = vmatprep.subr.mxu0 0.0
        %373 = vmatpush1.msra.mxu0 0.0
        %374 = vmatprep.subr.mxu0 0.0
        %375 = vmatpush1.msra.mxu0 0.0
        %376 = vmatprep.subr.mxu0 0.0
        %377 = vmatpush1.msra.mxu0 0.0
        %378 = vmatprep.subr.mxu0 0.0
        %379 = vmatpush1.msra.mxu0 0.0
        %380 = vmatprep.subr.mxu0 0.0
        %381 = vmatpush1.msra.mxu0 0.0
        %382 = vmatprep.subr.mxu0 0.0
        %383 = vmatpush1.msra.mxu0 0.0
        %384 = vmatprep.subr.mxu0 0.0
        %385 = vmatpush1.msra.mxu0 0.0
        %386 = vmatprep.subr.mxu0 0.0
        %387 = vmatpush1.msra.mxu0 0.0
        %388 = vmatprep.subr.mxu0 0.0
        %389 = vmatpush1.msra.mxu0 0.0
        %390 = vmatprep.subr.mxu0 0.0
        %391 = vmatpush1.msra.mxu0 0.0
        %392 = vmatprep.mubr.f32.mxu0 0.0
        %393 = vmatmul.mubr.f32.gmra.mrb[0].mxu0 %v323
        %v394 = vpop.f32.mrb[0].mxu0
        %v395 = vadd.f32 0.0, %v394
        %v396 = vpop.f32.mrb[0].mxu0
        %397 = vmatprep.mubr.f32.mxu0 0.0
        %398 = vmatmul.mubr.f32.gmra.mrb[0].mxu0 %v326
        %v399 = vpop.f32.mrb[0].mxu0
        %v400 = vadd.f32 0.0, %v399
        %v401 = vpop.f32.mrb[0].mxu0
        %402 = vdwg.mxu0
        %403 = vmatprep.subr.mxu0 0.0
        %404 = vmatpush1.msra.mxu0 %v294
        %405 = vmatprep.subr.mxu0 0.0
        %406 = vmatpush1.msra.mxu0 %v299
        %407 = vmatprep.subr.mxu0 0.0
        %408 = vmatpush1.msra.mxu0 0.0
        %409 = vmatprep.subr.mxu0 0.0
        %410 = vmatpush1.msra.mxu0 0.0
        %411 = vmatprep.subr.mxu0 0.0
        %412 = vmatpush1.msra.mxu0 0.0
        %413 = vmatprep.subr.mxu0 0.0
        %414 = vmatpush1.msra.mxu0 0.0
        %415 = vmatprep.subr.mxu0 0.0
        %416 = vmatpush1.msra.mxu0 0.0
        %417 = vmatprep.subr.mxu0 0.0
        %418 = vmatpush1.msra.mxu0 0.0
        %419 = vmatprep.subr.mxu0 0.0
        %420 = vmatpush1.msra.mxu0 0.0
        %421 = vmatprep.subr.mxu0 0.0
        %422 = vmatpush1.msra.mxu0 0.0
        %423 = vmatprep.subr.mxu0 0.0
        %424 = vmatpush1.msra.mxu0 0.0
        %425 = vmatprep.subr.mxu0 0.0
        %426 = vmatpush1.msra.mxu0 0.0
        %427 = vmatprep.subr.mxu0 0.0
        %428 = vmatpush1.msra.mxu0 0.0
        %429 = vmatprep.subr.mxu0 0.0
        %430 = vmatpush1.msra.mxu0 0.0
        %431 = vmatprep.subr.mxu0 0.0
        %432 = vmatpush1.msra.mxu0 0.0
        %433 = vmatprep.subr.mxu0 0.0
        %434 = vmatpush1.msra.mxu0 0.0
        %435 = vmatprep.subr.mxu0 0.0
        %436 = vmatpush1.msra.mxu0 0.0
        %437 = vmatprep.subr.mxu0 0.0
        %438 = vmatpush1.msra.mxu0 0.0
        %439 = vmatprep.subr.mxu0 0.0
        %440 = vmatpush1.msra.mxu0 0.0
        %441 = vmatprep.subr.mxu0 0.0
        %442 = vmatpush1.msra.mxu0 0.0
        %443 = vmatprep.subr.mxu0 0.0
        %444 = vmatpush1.msra.mxu0 0.0
        %445 = vmatprep.subr.mxu0 0.0
        %446 = vmatpush1.msra.mxu0 0.0
        %447 = vmatprep.subr.mxu0 0.0
        %448 = vmatpush1.msra.mxu0 0.0
        %449 = vmatprep.subr.mxu0 0.0
        %450 = vmatpush1.msra.mxu0 0.0
        %451 = vmatprep.subr.mxu0 0.0
        %452 = vmatpush1.msra.mxu0 0.0
        %453 = vmatprep.subr.mxu0 0.0
        %454 = vmatpush1.msra.mxu0 0.0
        %455 = vmatprep.subr.mxu0 0.0
        %456 = vmatpush1.msra.mxu0 0.0
        %457 = vmatprep.subr.mxu0 0.0
        %458 = vmatpush1.msra.mxu0 0.0
        %459 = vmatprep.subr.mxu0 0.0
        %460 = vmatpush1.msra.mxu0 0.0
        %461 = vmatprep.subr.mxu0 0.0
        %462 = vmatpush1.msra.mxu0 0.0
        %463 = vmatprep.subr.mxu0 0.0
        %464 = vmatpush1.msra.mxu0 0.0
        %465 = vmatprep.subr.mxu0 0.0
        %466 = vmatpush1.msra.mxu0 0.0
        %467 = vmatprep.mubr.f32.mxu0 0.0
        %468 = vmatmul.mubr.f32.gmra.mrb[0].mxu0 %v323
        %v469 = vpop.f32.mrb[0].mxu0
        %v470 = vadd.f32 0.0, %v469
        %v471 = vpop.f32.mrb[0].mxu0
        %472 = vmatprep.mubr.f32.mxu0 0.0
        %473 = vmatmul.mubr.f32.gmra.mrb[0].mxu0 %v326
        %v474 = vpop.f32.mrb[0].mxu0
        %v475 = vadd.f32 0.0, %v474
        %v476 = vpop.f32.mrb[0].mxu0
        %477 = vdwg.mxu0
        %478 = vmatprep.subr.mxu0 0.0
        %479 = vmatpush1.msra.mxu0 %v304
        %480 = vmatprep.subr.mxu0 0.0
        %481 = vmatpush1.msra.mxu0 %v309
        %482 = vmatprep.subr.mxu0 0.0
        %483 = vmatpush1.msra.mxu0 0.0
        %484 = vmatprep.subr.mxu0 0.0
        %485 = vmatpush1.msra.mxu0 0.0
        %486 = vmatprep.subr.mxu0 0.0
        %487 = vmatpush1.msra.mxu0 0.0
        %488 = vmatprep.subr.mxu0 0.0
        %489 = vmatpush1.msra.mxu0 0.0
        %490 = vmatprep.subr.mxu0 0.0
        %491 = vmatpush1.msra.mxu0 0.0
        %492 = vmatprep.subr.mxu0 0.0
        %493 = vmatpush1.msra.mxu0 0.0
        %494 = vmatprep.subr.mxu0 0.0
        %495 = vmatpush1.msra.mxu0 0.0
        %496 = vmatprep.subr.mxu0 0.0
        %497 = vmatpush1.msra.mxu0 0.0
        %498 = vmatprep.subr.mxu0 0.0
        %499 = vmatpush1.msra.mxu0 0.0
        %500 = vmatprep.subr.mxu0 0.0
        %501 = vmatpush1.msra.mxu0 0.0
        %502 = vmatprep.subr.mxu0 0.0
        %503 = vmatpush1.msra.mxu0 0.0
        %504 = vmatprep.subr.mxu0 0.0
        %505 = vmatpush1.msra.mxu0 0.0
        %506 = vmatprep.subr.mxu0 0.0
        %507 = vmatpush1.msra.mxu0 0.0
        %508 = vmatprep.subr.mxu0 0.0
        %509 = vmatpush1.msra.mxu0 0.0
        %510 = vmatprep.subr.mxu0 0.0
        %511 = vmatpush1.msra.mxu0 0.0
        %512 = vmatprep.subr.mxu0 0.0
        %513 = vmatpush1.msra.mxu0 0.0
        %514 = vmatprep.subr.mxu0 0.0
        %515 = vmatpush1.msra.mxu0 0.0
        %516 = vmatprep.subr.mxu0 0.0
        %517 = vmatpush1.msra.mxu0 0.0
        %518 = vmatprep.subr.mxu0 0.0
        %519 = vmatpush1.msra.mxu0 0.0
        %520 = vmatprep.subr.mxu0 0.0
        %521 = vmatpush1.msra.mxu0 0.0
        %522 = vmatprep.subr.mxu0 0.0
        %523 = vmatpush1.msra.mxu0 0.0
        %524 = vmatprep.subr.mxu0 0.0
        %525 = vmatpush1.msra.mxu0 0.0
        %526 = vmatprep.subr.mxu0 0.0
        %527 = vmatpush1.msra.mxu0 0.0
        %528 = vmatprep.subr.mxu0 0.0
        %529 = vmatpush1.msra.mxu0 0.0
        %530 = vmatprep.subr.mxu0 0.0
        %531 = vmatpush1.msra.mxu0 0.0
        %532 = vmatprep.subr.mxu0 0.0
        %533 = vmatpush1.msra.mxu0 0.0
        %534 = vmatprep.subr.mxu0 0.0
        %535 = vmatpush1.msra.mxu0 0.0
        %536 = vmatprep.subr.mxu0 0.0
        %537 = vmatpush1.msra.mxu0 0.0
        %538 = vmatprep.subr.mxu0 0.0
        %539 = vmatpush1.msra.mxu0 0.0
        %540 = vmatprep.subr.mxu0 0.0
        %541 = vmatpush1.msra.mxu0 0.0
        %542 = vmatprep.mubr.f32.mxu0 0.0
        %543 = vmatmul.mubr.f32.gmra.mrb[0].mxu0 %v323
        %v544 = vpop.f32.mrb[0].mxu0
        %v545 = vadd.f32 0.0, %v544
        %v546 = vpop.f32.mrb[0].mxu0
        %547 = vmatprep.mubr.f32.mxu0 0.0
        %548 = vmatmul.mubr.f32.gmra.mrb[0].mxu0 %v326
        %v549 = vpop.f32.mrb[0].mxu0
        %v550 = vadd.f32 0.0, %v549
        %v551 = vpop.f32.mrb[0].mxu0
        %552 = vdwg.mxu0
        %553 = vmatprep.subr.mxu0 0.0
        %554 = vmatpush1.msra.mxu0 %v314
        %555 = vmatprep.subr.mxu0 0.0
        %556 = vmatpush1.msra.mxu0 %v319
        %557 = vmatprep.subr.mxu0 0.0
        %558 = vmatpush1.msra.mxu0 0.0
        %559 = vmatprep.subr.mxu0 0.0
        %560 = vmatpush1.msra.mxu0 0.0
        %561 = vmatprep.subr.mxu0 0.0
        %562 = vmatpush1.msra.mxu0 0.0
        %563 = vmatprep.subr.mxu0 0.0
        %564 = vmatpush1.msra.mxu0 0.0
        %565 = vmatprep.subr.mxu0 0.0
        %566 = vmatpush1.msra.mxu0 0.0
        %567 = vmatprep.subr.mxu0 0.0
        %568 = vmatpush1.msra.mxu0 0.0
        %569 = vmatprep.subr.mxu0 0.0
        %570 = vmatpush1.msra.mxu0 0.0
        %571 = vmatprep.subr.mxu0 0.0
        %572 = vmatpush1.msra.mxu0 0.0
        %573 = vmatprep.subr.mxu0 0.0
        %574 = vmatpush1.msra.mxu0 0.0
        %575 = vmatprep.subr.mxu0 0.0
        %576 = vmatpush1.msra.mxu0 0.0
        %577 = vmatprep.subr.mxu0 0.0
        %578 = vmatpush1.msra.mxu0 0.0
        %579 = vmatprep.subr.mxu0 0.0
        %580 = vmatpush1.msra.mxu0 0.0
        %581 = vmatprep.subr.mxu0 0.0
        %582 = vmatpush1.msra.mxu0 0.0
        %583 = vmatprep.subr.mxu0 0.0
        %584 = vmatpush1.msra.mxu0 0.0
        %585 = vmatprep.subr.mxu0 0.0
        %586 = vmatpush1.msra.mxu0 0.0
        %587 = vmatprep.subr.mxu0 0.0
        %588 = vmatpush1.msra.mxu0 0.0
        %589 = vmatprep.subr.mxu0 0.0
        %590 = vmatpush1.msra.mxu0 0.0
        %591 = vmatprep.subr.mxu0 0.0
        %592 = vmatpush1.msra.mxu0 0.0
        %593 = vmatprep.subr.mxu0 0.0
        %594 = vmatpush1.msra.mxu0 0.0
        %595 = vmatprep.subr.mxu0 0.0
        %596 = vmatpush1.msra.mxu0 0.0
        %597 = vmatprep.subr.mxu0 0.0
        %598 = vmatpush1.msra.mxu0 0.0
        %599 = vmatprep.subr.mxu0 0.0
        %600 = vmatpush1.msra.mxu0 0.0
        %601 = vmatprep.subr.mxu0 0.0
        %602 = vmatpush1.msra.mxu0 0.0
        %603 = vmatprep.subr.mxu0 0.0
        %604 = vmatpush1.msra.mxu0 0.0
        %605 = vmatprep.subr.mxu0 0.0
        %606 = vmatpush1.msra.mxu0 0.0
        %607 = vmatprep.subr.mxu0 0.0
        %608 = vmatpush1.msra.mxu0 0.0
        %609 = vmatprep.subr.mxu0 0.0
        %610 = vmatpush1.msra.mxu0 0.0
        %611 = vmatprep.subr.mxu0 0.0
        %612 = vmatpush1.msra.mxu0 0.0
        %613 = vmatprep.subr.mxu0 0.0
        %614 = vmatpush1.msra.mxu0 0.0
        %615 = vmatprep.subr.mxu0 0.0
        %616 = vmatpush1.msra.mxu0 0.0
        %617 = vmatprep.mubr.f32.mxu0 0.0
        %618 = vmatmul.mubr.f32.gmra.mrb[0].mxu0 %v323
        %v619 = vpop.f32.mrb[0].mxu0
        %v620 = vadd.f32 0.0, %v619
        %v621 = vpop.f32.mrb[0].mxu0
        %622 = vmatprep.mubr.f32.mxu0 0.0
        %623 = vmatmul.mubr.f32.gmra.mrb[0].mxu0 %v326
        %v624 = vpop.f32.mrb[0].mxu0
        %v625 = vadd.f32 0.0, %v624
        %v626 = vpop.f32.mrb[0].mxu0
        %627 = vdwg.mxu0
        %628 = vst.msk [vmem:[%s140] sm:$0xff] %vm192, %v395
        %629 = vst.msk [vmem:[%s140 + $0x8] sm:$0xff] %vm192, %v400
        %630 = vst.msk [vmem:[%s140 + $0x10] sm:$0xff] %vm192, %v470
        %631 = vst.msk [vmem:[%s140 + $0x18] sm:$0xff] %vm192, %v475
        %632 = vst.msk [vmem:[%s140 + $0x20] sm:$0xff] %vm192, %v545
        %633 = vst.msk [vmem:[%s140 + $0x28] sm:$0xff] %vm192, %v550
        %634 = vst.msk [vmem:[%s140 + $0x30] sm:$0xff] %vm192, %v620
        %635 = vst.msk [vmem:[%s140 + $0x38] sm:$0xff] %vm192, %v625
        %s636 = smul.u32 %s23, 2
        %s637 = sadd.s32 %s636, 1
        %s638 = smul.u32 %s637, 2
        %s639 = sld [smem:[#allocation3 + %s638]]
        %s640 = sadd.s32 %s638, 1
        %s641 = sld [smem:[#allocation3 + %s640]]
        %v642 = vstv %s639
        %v643 = vadd.s32 %v151, %v642
        %v644 = vsub.s32 %v643, 4
        %vm645 = vcmp.gt.s32.totalorder %v644, 0
        %v646 = vsel %vm645, %v644, 0
        %vm647 = vcmp.lt.s32.totalorder %v646, 15
        %v648 = vsel %vm647, %v646, 15
        %vm649 = vcmp.eq.s32.totalorder %v148, %v648
        %vm650 = vcmp.eq.s32.totalorder %v149, %v648
        %v651 = vsel %vm649, 1, 0
        %v652 = vsel %vm650, 1, 0
        %v653 = vcvt.s32.f32 %v651
        %v654 = vcvt.s32.f32 %v652
        %v655 = vstv %s641
        %v656 = vadd.s32 %v148, %v655
        %v657 = vadd.s32 %v149, %v655
        %v658 = vsub.s32 %v656, 4
        %v659 = vsub.s32 %v657, 4
        %vm660 = vcmp.gt.s32.totalorder %v658, 0
        %v661 = vsel %vm660, %v658, 0
        %vm662 = vcmp.gt.s32.totalorder %v659, 0
        %v663 = vsel %vm662, %v659, 0
        %vm664 = vcmp.lt.s32.totalorder %v661, 15
        %v665 = vsel %vm664, %v661, 15
        %vm666 = vcmp.lt.s32.totalorder %v663, 15
        %v667 = vsel %vm666, %v663, 15
        %vm668 = vcmp.eq.s32.totalorder %v151, %v665
        %vm669 = vcmp.eq.s32.totalorder %v151, %v667
        %v670 = vsel %vm668, 1, 0
        %v671 = vsel %vm669, 1, 0
        %v672 = vcvt.s32.f32 %v670
        %v673 = vcvt.s32.f32 %v671
        %s674 = scalar_lea.vmem %s122, 64 [#allocation4]
        %v675 = vld [vmem:[%s674] sm:$0xff]
        %v676 = vld [vmem:[%s674 + $0x8] sm:$0xff]
        %v677 = vld [vmem:[%s674 + $0x10] sm:$0xff]
        %v678 = vld [vmem:[%s674 + $0x18] sm:$0xff]
        %v679 = vld [vmem:[%s674 + $0x20] sm:$0xff]
        %v680 = vld [vmem:[%s674 + $0x28] sm:$0xff]
        %v681 = vld [vmem:[%s674 + $0x30] sm:$0xff]
        %v682 = vld [vmem:[%s674 + $0x38] sm:$0xff]
        %v684 = vsel %vm192, %v675, 0
        %v687 = vsel %vm192, %v676, 0
        %v690 = vsel %vm192, %v677, 0
        %v693 = vsel %vm192, %v678, 0
        %v696 = vsel %vm192, %v679, 0
        %v699 = vsel %vm192, %v680, 0
        %v702 = vsel %vm192, %v681, 0
        %v705 = vsel %vm192, %v682, 0
        %707 = vmatprep.subr.mxu0 0.0
        %708 = vmatpush1.msra.mxu0 %v653
        %709 = vmatprep.subr.mxu0 0.0
        %710 = vmatpush1.msra.mxu0 %v654
        %711 = vmatprep.subr.mxu0 0.0
        %712 = vmatpush1.msra.mxu0 0.0
        %713 = vmatprep.subr.mxu0 0.0
        %714 = vmatpush1.msra.mxu0 0.0
        %715 = vmatprep.subr.mxu0 0.0
        %716 = vmatpush1.msra.mxu0 0.0
        %717 = vmatprep.subr.mxu0 0.0
        %718 = vmatpush1.msra.mxu0 0.0
        %719 = vmatprep.subr.mxu0 0.0
        %720 = vmatpush1.msra.mxu0 0.0
        %721 = vmatprep.subr.mxu0 0.0
        %722 = vmatpush1.msra.mxu0 0.0
        %723 = vmatprep.subr.mxu0 0.0
        %724 = vmatpush1.msra.mxu0 0.0
        %725 = vmatprep.subr.mxu0 0.0
        %726 = vmatpush1.msra.mxu0 0.0
        %727 = vmatprep.subr.mxu0 0.0
        %728 = vmatpush1.msra.mxu0 0.0
        %729 = vmatprep.subr.mxu0 0.0
        %730 = vmatpush1.msra.mxu0 0.0
        %731 = vmatprep.subr.mxu0 0.0
        %732 = vmatpush1.msra.mxu0 0.0
        %733 = vmatprep.subr.mxu0 0.0
        %734 = vmatpush1.msra.mxu0 0.0
        %735 = vmatprep.subr.mxu0 0.0
        %736 = vmatpush1.msra.mxu0 0.0
        %737 = vmatprep.subr.mxu0 0.0
        %738 = vmatpush1.msra.mxu0 0.0
        %739 = vmatprep.subr.mxu0 0.0
        %740 = vmatpush1.msra.mxu0 0.0
        %741 = vmatprep.subr.mxu0 0.0
        %742 = vmatpush1.msra.mxu0 0.0
        %743 = vmatprep.subr.mxu0 0.0
        %744 = vmatpush1.msra.mxu0 0.0
        %745 = vmatprep.subr.mxu0 0.0
        %746 = vmatpush1.msra.mxu0 0.0
        %747 = vmatprep.subr.mxu0 0.0
        %748 = vmatpush1.msra.mxu0 0.0
        %749 = vmatprep.subr.mxu0 0.0
        %750 = vmatpush1.msra.mxu0 0.0
        %751 = vmatprep.subr.mxu0 0.0
        %752 = vmatpush1.msra.mxu0 0.0
        %753 = vmatprep.subr.mxu0 0.0
        %754 = vmatpush1.msra.mxu0 0.0
        %755 = vmatprep.subr.mxu0 0.0
        %756 = vmatpush1.msra.mxu0 0.0
        %757 = vmatprep.subr.mxu0 0.0
        %758 = vmatpush1.msra.mxu0 0.0
        %759 = vmatprep.subr.mxu0 0.0
        %760 = vmatpush1.msra.mxu0 0.0
        %761 = vmatprep.subr.mxu0 0.0
        %762 = vmatpush1.msra.mxu0 0.0
        %763 = vmatprep.subr.mxu0 0.0
        %764 = vmatpush1.msra.mxu0 0.0
        %765 = vmatprep.subr.mxu0 0.0
        %766 = vmatpush1.msra.mxu0 0.0
        %767 = vmatprep.subr.mxu0 0.0
        %768 = vmatpush1.msra.mxu0 0.0
        %769 = vmatprep.subr.mxu0 0.0
        %770 = vmatpush1.msra.mxu0 0.0
        %771 = vmatprep.mubr.f32.mxu0 0.0
        %772 = vmatmul.mubr.f32.gmra.mrb[0].mxu0 %v684
        %v773 = vpop.f32.mrb[0].mxu0
        %v774 = vadd.f32 0.0, %v773
        %v775 = vpop.f32.mrb[0].mxu0
        %776 = vmatprep.mubr.f32.mxu0 0.0
        %777 = vmatmul.mubr.f32.gmra.mrb[0].mxu0 %v687
        %v778 = vpop.f32.mrb[0].mxu0
        %v779 = vadd.f32 0.0, %v778
        %v780 = vpop.f32.mrb[0].mxu0
        %781 = vmatprep.mubr.f32.mxu0 0.0
        %782 = vmatmul.mubr.f32.gmra.mrb[0].mxu0 %v690
        %v783 = vpop.f32.mrb[0].mxu0
        %v784 = vadd.f32 0.0, %v783
        %v785 = vpop.f32.mrb[0].mxu0
        %786 = vmatprep.mubr.f32.mxu0 0.0
        %787 = vmatmul.mubr.f32.gmra.mrb[0].mxu0 %v693
        %v788 = vpop.f32.mrb[0].mxu0
        %v789 = vadd.f32 0.0, %v788
        %v790 = vpop.f32.mrb[0].mxu0
        %791 = vmatprep.mubr.f32.mxu0 0.0
        %792 = vmatmul.mubr.f32.gmra.mrb[0].mxu0 %v696
        %v793 = vpop.f32.mrb[0].mxu0
        %v794 = vadd.f32 0.0, %v793
        %v795 = vpop.f32.mrb[0].mxu0
        %796 = vmatprep.mubr.f32.mxu0 0.0
        %797 = vmatmul.mubr.f32.gmra.mrb[0].mxu0 %v699
        %v798 = vpop.f32.mrb[0].mxu0
        %v799 = vadd.f32 0.0, %v798
        %v800 = vpop.f32.mrb[0].mxu0
        %801 = vmatprep.mubr.f32.mxu0 0.0
        %802 = vmatmul.mubr.f32.gmra.mrb[0].mxu0 %v702
        %v803 = vpop.f32.mrb[0].mxu0
        %v804 = vadd.f32 0.0, %v803
        %v805 = vpop.f32.mrb[0].mxu0
        %806 = vmatprep.mubr.f32.mxu0 0.0
        %807 = vmatmul.mubr.f32.gmra.mrb[0].mxu0 %v705
        %v808 = vpop.f32.mrb[0].mxu0
        %v809 = vadd.f32 0.0, %v808
        %v810 = vpop.f32.mrb[0].mxu0
        %811 = vdwg.mxu0
        %v813 = vsel %vm192, %v672, 0
        %v816 = vsel %vm192, %v673, 0
        %818 = vmatprep.subr.mxu0 0.0
        %819 = vmatpush1.msra.mxu0 %v774
        %820 = vmatprep.subr.mxu0 0.0
        %821 = vmatpush1.msra.mxu0 %v779
        %822 = vmatprep.subr.mxu0 0.0
        %823 = vmatpush1.msra.mxu0 0.0
        %824 = vmatprep.subr.mxu0 0.0
        %825 = vmatpush1.msra.mxu0 0.0
        %826 = vmatprep.subr.mxu0 0.0
        %827 = vmatpush1.msra.mxu0 0.0
        %828 = vmatprep.subr.mxu0 0.0
        %829 = vmatpush1.msra.mxu0 0.0
        %830 = vmatprep.subr.mxu0 0.0
        %831 = vmatpush1.msra.mxu0 0.0
        %832 = vmatprep.subr.mxu0 0.0
        %833 = vmatpush1.msra.mxu0 0.0
        %834 = vmatprep.subr.mxu0 0.0
        %835 = vmatpush1.msra.mxu0 0.0
        %836 = vmatprep.subr.mxu0 0.0
        %837 = vmatpush1.msra.mxu0 0.0
        %838 = vmatprep.subr.mxu0 0.0
        %839 = vmatpush1.msra.mxu0 0.0
        %840 = vmatprep.subr.mxu0 0.0
        %841 = vmatpush1.msra.mxu0 0.0
        %842 = vmatprep.subr.mxu0 0.0
        %843 = vmatpush1.msra.mxu0 0.0
        %844 = vmatprep.subr.mxu0 0.0
        %845 = vmatpush1.msra.mxu0 0.0
        %846 = vmatprep.subr.mxu0 0.0
        %847 = vmatpush1.msra.mxu0 0.0
        %848 = vmatprep.subr.mxu0 0.0
        %849 = vmatpush1.msra.mxu0 0.0
        %850 = vmatprep.subr.mxu0 0.0
        %851 = vmatpush1.msra.mxu0 0.0
        %852 = vmatprep.subr.mxu0 0.0
        %853 = vmatpush1.msra.mxu0 0.0
        %854 = vmatprep.subr.mxu0 0.0
        %855 = vmatpush1.msra.mxu0 0.0
        %856 = vmatprep.subr.mxu0 0.0
        %857 = vmatpush1.msra.mxu0 0.0
        %858 = vmatprep.subr.mxu0 0.0
        %859 = vmatpush1.msra.mxu0 0.0
        %860 = vmatprep.subr.mxu0 0.0
        %861 = vmatpush1.msra.mxu0 0.0
        %862 = vmatprep.subr.mxu0 0.0
        %863 = vmatpush1.msra.mxu0 0.0
        %864 = vmatprep.subr.mxu0 0.0
        %865 = vmatpush1.msra.mxu0 0.0
        %866 = vmatprep.subr.mxu0 0.0
        %867 = vmatpush1.msra.mxu0 0.0
        %868 = vmatprep.subr.mxu0 0.0
        %869 = vmatpush1.msra.mxu0 0.0
        %870 = vmatprep.subr.mxu0 0.0
        %871 = vmatpush1.msra.mxu0 0.0
        %872 = vmatprep.subr.mxu0 0.0
        %873 = vmatpush1.msra.mxu0 0.0
        %874 = vmatprep.subr.mxu0 0.0
        %875 = vmatpush1.msra.mxu0 0.0
        %876 = vmatprep.subr.mxu0 0.0
        %877 = vmatpush1.msra.mxu0 0.0
        %878 = vmatprep.subr.mxu0 0.0
        %879 = vmatpush1.msra.mxu0 0.0
        %880 = vmatprep.subr.mxu0 0.0
        %881 = vmatpush1.msra.mxu0 0.0
        %882 = vmatprep.mubr.f32.mxu0 0.0
        %883 = vmatmul.mubr.f32.gmra.mrb[0].mxu0 %v813
        %v884 = vpop.f32.mrb[0].mxu0
        %v885 = vadd.f32 0.0, %v884
        %v886 = vpop.f32.mrb[0].mxu0
        %887 = vmatprep.mubr.f32.mxu0 0.0
        %888 = vmatmul.mubr.f32.gmra.mrb[0].mxu0 %v816
        %v889 = vpop.f32.mrb[0].mxu0
        %v890 = vadd.f32 0.0, %v889
        %v891 = vpop.f32.mrb[0].mxu0
        %892 = vdwg.mxu0
        %893 = vmatprep.subr.mxu0 0.0
        %894 = vmatpush1.msra.mxu0 %v784
        %895 = vmatprep.subr.mxu0 0.0
        %896 = vmatpush1.msra.mxu0 %v789
        %897 = vmatprep.subr.mxu0 0.0
        %898 = vmatpush1.msra.mxu0 0.0
        %899 = vmatprep.subr.mxu0 0.0
        %900 = vmatpush1.msra.mxu0 0.0
        %901 = vmatprep.subr.mxu0 0.0
        %902 = vmatpush1.msra.mxu0 0.0
        %903 = vmatprep.subr.mxu0 0.0
        %904 = vmatpush1.msra.mxu0 0.0
        %905 = vmatprep.subr.mxu0 0.0
        %906 = vmatpush1.msra.mxu0 0.0
        %907 = vmatprep.subr.mxu0 0.0
        %908 = vmatpush1.msra.mxu0 0.0
        %909 = vmatprep.subr.mxu0 0.0
        %910 = vmatpush1.msra.mxu0 0.0
        %911 = vmatprep.subr.mxu0 0.0
        %912 = vmatpush1.msra.mxu0 0.0
        %913 = vmatprep.subr.mxu0 0.0
        %914 = vmatpush1.msra.mxu0 0.0
        %915 = vmatprep.subr.mxu0 0.0
        %916 = vmatpush1.msra.mxu0 0.0
        %917 = vmatprep.subr.mxu0 0.0
        %918 = vmatpush1.msra.mxu0 0.0
        %919 = vmatprep.subr.mxu0 0.0
        %920 = vmatpush1.msra.mxu0 0.0
        %921 = vmatprep.subr.mxu0 0.0
        %922 = vmatpush1.msra.mxu0 0.0
        %923 = vmatprep.subr.mxu0 0.0
        %924 = vmatpush1.msra.mxu0 0.0
        %925 = vmatprep.subr.mxu0 0.0
        %926 = vmatpush1.msra.mxu0 0.0
        %927 = vmatprep.subr.mxu0 0.0
        %928 = vmatpush1.msra.mxu0 0.0
        %929 = vmatprep.subr.mxu0 0.0
        %930 = vmatpush1.msra.mxu0 0.0
        %931 = vmatprep.subr.mxu0 0.0
        %932 = vmatpush1.msra.mxu0 0.0
        %933 = vmatprep.subr.mxu0 0.0
        %934 = vmatpush1.msra.mxu0 0.0
        %935 = vmatprep.subr.mxu0 0.0
        %936 = vmatpush1.msra.mxu0 0.0
        %937 = vmatprep.subr.mxu0 0.0
        %938 = vmatpush1.msra.mxu0 0.0
        %939 = vmatprep.subr.mxu0 0.0
        %940 = vmatpush1.msra.mxu0 0.0
        %941 = vmatprep.subr.mxu0 0.0
        %942 = vmatpush1.msra.mxu0 0.0
        %943 = vmatprep.subr.mxu0 0.0
        %944 = vmatpush1.msra.mxu0 0.0
        %945 = vmatprep.subr.mxu0 0.0
        %946 = vmatpush1.msra.mxu0 0.0
        %947 = vmatprep.subr.mxu0 0.0
        %948 = vmatpush1.msra.mxu0 0.0
        %949 = vmatprep.subr.mxu0 0.0
        %950 = vmatpush1.msra.mxu0 0.0
        %951 = vmatprep.subr.mxu0 0.0
        %952 = vmatpush1.msra.mxu0 0.0
        %953 = vmatprep.subr.mxu0 0.0
        %954 = vmatpush1.msra.mxu0 0.0
        %955 = vmatprep.subr.mxu0 0.0
        %956 = vmatpush1.msra.mxu0 0.0
        %957 = vmatprep.mubr.f32.mxu0 0.0
        %958 = vmatmul.mubr.f32.gmra.mrb[0].mxu0 %v813
        %v959 = vpop.f32.mrb[0].mxu0
        %v960 = vadd.f32 0.0, %v959
        %v961 = vpop.f32.mrb[0].mxu0
        %962 = vmatprep.mubr.f32.mxu0 0.0
        %963 = vmatmul.mubr.f32.gmra.mrb[0].mxu0 %v816
        %v964 = vpop.f32.mrb[0].mxu0
        %v965 = vadd.f32 0.0, %v964
        %v966 = vpop.f32.mrb[0].mxu0
        %967 = vdwg.mxu0
        %968 = vmatprep.subr.mxu0 0.0
        %969 = vmatpush1.msra.mxu0 %v794
        %970 = vmatprep.subr.mxu0 0.0
        %971 = vmatpush1.msra.mxu0 %v799
        %972 = vmatprep.subr.mxu0 0.0
        %973 = vmatpush1.msra.mxu0 0.0
        %974 = vmatprep.subr.mxu0 0.0
        %975 = vmatpush1.msra.mxu0 0.0
        %976 = vmatprep.subr.mxu0 0.0
        %977 = vmatpush1.msra.mxu0 0.0
        %978 = vmatprep.subr.mxu0 0.0
        %979 = vmatpush1.msra.mxu0 0.0
        %980 = vmatprep.subr.mxu0 0.0
        %981 = vmatpush1.msra.mxu0 0.0
        %982 = vmatprep.subr.mxu0 0.0
        %983 = vmatpush1.msra.mxu0 0.0
        %984 = vmatprep.subr.mxu0 0.0
        %985 = vmatpush1.msra.mxu0 0.0
        %986 = vmatprep.subr.mxu0 0.0
        %987 = vmatpush1.msra.mxu0 0.0
        %988 = vmatprep.subr.mxu0 0.0
        %989 = vmatpush1.msra.mxu0 0.0
        %990 = vmatprep.subr.mxu0 0.0
        %991 = vmatpush1.msra.mxu0 0.0
        %992 = vmatprep.subr.mxu0 0.0
        %993 = vmatpush1.msra.mxu0 0.0
        %994 = vmatprep.subr.mxu0 0.0
        %995 = vmatpush1.msra.mxu0 0.0
        %996 = vmatprep.subr.mxu0 0.0
        %997 = vmatpush1.msra.mxu0 0.0
        %998 = vmatprep.subr.mxu0 0.0
        %999 = vmatpush1.msra.mxu0 0.0
        %1000 = vmatprep.subr.mxu0 0.0
        %1001 = vmatpush1.msra.mxu0 0.0
        %1002 = vmatprep.subr.mxu0 0.0
        %1003 = vmatpush1.msra.mxu0 0.0
        %1004 = vmatprep.subr.mxu0 0.0
        %1005 = vmatpush1.msra.mxu0 0.0
        %1006 = vmatprep.subr.mxu0 0.0
        %1007 = vmatpush1.msra.mxu0 0.0
        %1008 = vmatprep.subr.mxu0 0.0
        %1009 = vmatpush1.msra.mxu0 0.0
        %1010 = vmatprep.subr.mxu0 0.0
        %1011 = vmatpush1.msra.mxu0 0.0
        %1012 = vmatprep.subr.mxu0 0.0
        %1013 = vmatpush1.msra.mxu0 0.0
        %1014 = vmatprep.subr.mxu0 0.0
        %1015 = vmatpush1.msra.mxu0 0.0
        %1016 = vmatprep.subr.mxu0 0.0
        %1017 = vmatpush1.msra.mxu0 0.0
        %1018 = vmatprep.subr.mxu0 0.0
        %1019 = vmatpush1.msra.mxu0 0.0
        %1020 = vmatprep.subr.mxu0 0.0
        %1021 = vmatpush1.msra.mxu0 0.0
        %1022 = vmatprep.subr.mxu0 0.0
        %1023 = vmatpush1.msra.mxu0 0.0
        %1024 = vmatprep.subr.mxu0 0.0
        %1025 = vmatpush1.msra.mxu0 0.0
        %1026 = vmatprep.subr.mxu0 0.0
        %1027 = vmatpush1.msra.mxu0 0.0
        %1028 = vmatprep.subr.mxu0 0.0
        %1029 = vmatpush1.msra.mxu0 0.0
        %1030 = vmatprep.subr.mxu0 0.0
        %1031 = vmatpush1.msra.mxu0 0.0
        %1032 = vmatprep.mubr.f32.mxu0 0.0
        %1033 = vmatmul.mubr.f32.gmra.mrb[0].mxu0 %v813
        %v1034 = vpop.f32.mrb[0].mxu0
        %v1035 = vadd.f32 0.0, %v1034
        %v1036 = vpop.f32.mrb[0].mxu0
        %1037 = vmatprep.mubr.f32.mxu0 0.0
        %1038 = vmatmul.mubr.f32.gmra.mrb[0].mxu0 %v816
        %v1039 = vpop.f32.mrb[0].mxu0
        %v1040 = vadd.f32 0.0, %v1039
        %v1041 = vpop.f32.mrb[0].mxu0
        %1042 = vdwg.mxu0
        %1043 = vmatprep.subr.mxu0 0.0
        %1044 = vmatpush1.msra.mxu0 %v804
        %1045 = vmatprep.subr.mxu0 0.0
        %1046 = vmatpush1.msra.mxu0 %v809
        %1047 = vmatprep.subr.mxu0 0.0
        %1048 = vmatpush1.msra.mxu0 0.0
        %1049 = vmatprep.subr.mxu0 0.0
        %1050 = vmatpush1.msra.mxu0 0.0
        %1051 = vmatprep.subr.mxu0 0.0
        %1052 = vmatpush1.msra.mxu0 0.0
        %1053 = vmatprep.subr.mxu0 0.0
        %1054 = vmatpush1.msra.mxu0 0.0
        %1055 = vmatprep.subr.mxu0 0.0
        %1056 = vmatpush1.msra.mxu0 0.0
        %1057 = vmatprep.subr.mxu0 0.0
        %1058 = vmatpush1.msra.mxu0 0.0
        %1059 = vmatprep.subr.mxu0 0.0
        %1060 = vmatpush1.msra.mxu0 0.0
        %1061 = vmatprep.subr.mxu0 0.0
        %1062 = vmatpush1.msra.mxu0 0.0
        %1063 = vmatprep.subr.mxu0 0.0
        %1064 = vmatpush1.msra.mxu0 0.0
        %1065 = vmatprep.subr.mxu0 0.0
        %1066 = vmatpush1.msra.mxu0 0.0
        %1067 = vmatprep.subr.mxu0 0.0
        %1068 = vmatpush1.msra.mxu0 0.0
        %1069 = vmatprep.subr.mxu0 0.0
        %1070 = vmatpush1.msra.mxu0 0.0
        %1071 = vmatprep.subr.mxu0 0.0
        %1072 = vmatpush1.msra.mxu0 0.0
        %1073 = vmatprep.subr.mxu0 0.0
        %1074 = vmatpush1.msra.mxu0 0.0
        %1075 = vmatprep.subr.mxu0 0.0
        %1076 = vmatpush1.msra.mxu0 0.0
        %1077 = vmatprep.subr.mxu0 0.0
        %1078 = vmatpush1.msra.mxu0 0.0
        %1079 = vmatprep.subr.mxu0 0.0
        %1080 = vmatpush1.msra.mxu0 0.0
        %1081 = vmatprep.subr.mxu0 0.0
        %1082 = vmatpush1.msra.mxu0 0.0
        %1083 = vmatprep.subr.mxu0 0.0
        %1084 = vmatpush1.msra.mxu0 0.0
        %1085 = vmatprep.subr.mxu0 0.0
        %1086 = vmatpush1.msra.mxu0 0.0
        %1087 = vmatprep.subr.mxu0 0.0
        %1088 = vmatpush1.msra.mxu0 0.0
        %1089 = vmatprep.subr.mxu0 0.0
        %1090 = vmatpush1.msra.mxu0 0.0
        %1091 = vmatprep.subr.mxu0 0.0
        %1092 = vmatpush1.msra.mxu0 0.0
        %1093 = vmatprep.subr.mxu0 0.0
        %1094 = vmatpush1.msra.mxu0 0.0
        %1095 = vmatprep.subr.mxu0 0.0
        %1096 = vmatpush1.msra.mxu0 0.0
        %1097 = vmatprep.subr.mxu0 0.0
        %1098 = vmatpush1.msra.mxu0 0.0
        %1099 = vmatprep.subr.mxu0 0.0
        %1100 = vmatpush1.msra.mxu0 0.0
        %1101 = vmatprep.subr.mxu0 0.0
        %1102 = vmatpush1.msra.mxu0 0.0
        %1103 = vmatprep.subr.mxu0 0.0
        %1104 = vmatpush1.msra.mxu0 0.0
        %1105 = vmatprep.subr.mxu0 0.0
        %1106 = vmatpush1.msra.mxu0 0.0
        %1107 = vmatprep.mubr.f32.mxu0 0.0
        %1108 = vmatmul.mubr.f32.gmra.mrb[0].mxu0 %v813
        %v1109 = vpop.f32.mrb[0].mxu0
        %v1110 = vadd.f32 0.0, %v1109
        %v1111 = vpop.f32.mrb[0].mxu0
        %1112 = vmatprep.mubr.f32.mxu0 0.0
        %1113 = vmatmul.mubr.f32.gmra.mrb[0].mxu0 %v816
        %v1114 = vpop.f32.mrb[0].mxu0
        %v1115 = vadd.f32 0.0, %v1114
        %v1116 = vpop.f32.mrb[0].mxu0
        %1117 = vdwg.mxu0
        %s1118 = scalar_lea.vmem %s140, 64 [#allocation7]
        %1119 = vst.msk [vmem:[%s1118] sm:$0xff] %vm192, %v885
        %1120 = vst.msk [vmem:[%s1118 + $0x8] sm:$0xff] %vm192, %v890
        %1121 = vst.msk [vmem:[%s1118 + $0x10] sm:$0xff] %vm192, %v960
        %1122 = vst.msk [vmem:[%s1118 + $0x18] sm:$0xff] %vm192, %v965
        %1123 = vst.msk [vmem:[%s1118 + $0x20] sm:$0xff] %vm192, %v1035
        %1124 = vst.msk [vmem:[%s1118 + $0x28] sm:$0xff] %vm192, %v1040
        %1125 = vst.msk [vmem:[%s1118 + $0x30] sm:$0xff] %vm192, %v1110
        %1126 = vst.msk [vmem:[%s1118 + $0x38] sm:$0xff] %vm192, %v1115
        %s1127 = sand.u32 %s57, 1
        %s1128 = scalar_lea.sflag [#allocation6], %s1127
        %s1129 = sand.u32 %s57, 1
        %s1130 = smul.addr %s1129, 128
        %s1131 = scalar_lea.vmem [#allocation7], %s1130
        // Predicated region
        $region29: #{tpu_custom_call.1} parent=23 // pred_check
          %p1132 = pneg %p67
        $region30: #{tpu_custom_call.1} parent=23 // pred_check_branch
          %1134 = sbr.rel (%p1132) target = $region32
        $region31: #{tpu_custom_call.1} parent=23 // pred_region
          %s1135 = smul.u32 2, %s23
          %s1137 = ssub.s32 2048, 2048
          %1138 = vsyncadd %s1128, %s1137
          %s1139 = smul.addr %s1135, 8
          %s1140 = smul.addr %s1139, 128
          %s1141 = scalar_lea.hbm %s2, %s1140
          %s1142 = sshll.u32 %s1131, 4
          %s1143 = int_to_ptr.vmem [resolvable:$true] %s1142
          %1148 = dma.vmem_to_hbm [thread:$0]  %s1143, 2048, %s1141, %s1128, 128, 128, 8
        $region32: #{tpu_custom_call.1} parent=23 // pred_fallthru
          _
      $region24: #{tpu_custom_call.1} parent=5 // pred_fallthru
        _
      %p1149 = scmp.le.s32.totalorder 2, %s18
      // Predicated region
      $region33: #{tpu_custom_call.1} parent=5 // pred_check
        %p1150 = pneg %p1149
      $region34: #{tpu_custom_call.1} parent=5 // pred_check_branch
        %1152 = sbr.rel (%p1150) target = $region36
      $region35: #{tpu_custom_call.1} parent=5 // pred_region
        %s1153 = ssub.s32 %s18, 2
        // Predicated region
        $region37: #{tpu_custom_call.1} parent=35 // pred_check
          %p1154 = pneg %p73
        $region38: #{tpu_custom_call.1} parent=35 // pred_check_branch
          %1156 = sbr.rel (%p1154) target = $region40
        $region39: #{tpu_custom_call.1} parent=35 // pred_region
          %s1157 = sand.u32 %s58, 1
          %s1158 = scalar_lea.sflag [#allocation6], %s1157
          %s1159 = sand.u32 %s58, 1
          %s1160 = smul.addr %s1159, 128
          %s1161 = scalar_lea.vmem [#allocation7], %s1160
          %1162 = dma.done %s1158, 2048
        $region40: #{tpu_custom_call.1} parent=35 // pred_fallthru
          _
      $region36: #{tpu_custom_call.1} parent=5 // pred_fallthru
        _
    $region6: #{tpu_custom_call.1} parent=1 // loop_footer
      %s22 = sadd.s32 1, %s18
    $region7: #{tpu_custom_call.1} parent=1 // loop_footer_branch
      %17 = sbr.rel target = $region3
    $region8: #{tpu_custom_call.1} parent=1 // loop_exit
      _
    %1163 = vsyncpa [#allocation5], 1
    %s1164 = scalar_lea.sflag [#allocation5], 1
    %1165 = vsyncpa %s1164, 1
    %1166 = vsyncpa [#allocation6], 1
    %s1167 = scalar_lea.sflag [#allocation6], 1
    %1168 = vsyncpa %s1167, 1

</llo_original>
